<compile_context>
chip_gen: v7x
topology: tpu7x:2x2x1
jax: 0.10.0
libtpu: 0.0.40
codegen_flags: <defaults>
</compile_context>

<pallas_src>
import jax
import jax.numpy as jnp
from jax.experimental import pallas as pl
from jax.experimental.pallas import tpu as pltpu

HP = 128   # lane-padded feature width (H=32 -> 128); also >= 100 atom types
SP = 8     # sublane-padded spatial dims (S=3 -> 8)
GP = 8     # sublane-padded graph rows for the output tile (G=2 -> 8)


def make_negnn_kernel(num_layers, emb_off, wpos_off, gin_off, wp1_off, wp2_off):
    def kernel(onehot_ref, pos_ref, adji_ref, pool_ref, wslab_ref, bias_ref,
               out_ref):
        f32 = jnp.float32
        bf16 = jnp.bfloat16

        # ---- Atom-embedding "gather" as a one-hot matmul on the MXU. The
        # table rows are the folded atom contribution of f_combine
        # (emb @ Wca), lane-padded and stored bf16 inside the weight slab. ----
        gath = jnp.dot(onehot_ref[...], wslab_ref[emb_off:emb_off + HP, :],
                       preferred_element_type=f32)

        # ---- Initial node embedding (exact fold of f_pos_embed + f_combine):
        #   x = ReLU( emb_fold[z] + pos @ Wpos_fold + b_fold ) ----
        x = (gath
             + jnp.dot(pos_ref[...], wslab_ref[wpos_off:wpos_off + SP, :],
                       preferred_element_type=f32)
             + bias_ref[0:1, :])
        x = jnp.maximum(x, 0.0)

        # ---- GIN layers: mlp((A + I) x), eps = 0 (A+I precomputed) ----
        adji = adji_ref[...]                       # (N, N) bf16
        for l in range(num_layers):
            w_base = gin_off + l * 2 * HP
            w1 = wslab_ref[w_base:w_base + HP, :]
            w2 = wslab_ref[w_base + HP:w_base + 2 * HP, :]
            b1 = bias_ref[1 + 2 * l:2 + 2 * l, :]          # f32 rows
            b2 = bias_ref[2 + 2 * l:3 + 2 * l, :]
            m = jnp.dot(adji, x.astype(bf16), preferred_element_type=f32)
            h = jnp.maximum(
                jnp.dot(m.astype(bf16), w1, preferred_element_type=f32) + b1,
                0.0)
            x = jnp.dot(h.astype(bf16), w2, preferred_element_type=f32) + b2
            if l < num_layers - 1:     # BasicGNN: no activation after last conv
                x = jnp.maximum(x, 0.0)

        # ---- SumAggregation over graphs (pool[g, n] = 1 iff batch[n] == g),
        # pool padded to 8 rows so everything downstream is a full tile. ----
        aggr = jnp.dot(pool_ref[...], x.astype(bf16), preferred_element_type=f32)

        # ---- f_predict: Linear -> ReLU -> Linear(., 1) (lane-padded head) ----
        wp1 = wslab_ref[wp1_off:wp1_off + HP, :]
        wp2 = wslab_ref[wp2_off:wp2_off + HP, :]
        bp1 = bias_ref[1 + 2 * num_layers:2 + 2 * num_layers, :]
        bp2 = bias_ref[2 + 2 * num_layers:3 + 2 * num_layers, :]
        p = jnp.maximum(
            jnp.dot(aggr.astype(bf16), wp1, preferred_element_type=f32) + bp1,
            0.0)
        out_ref[...] = (jnp.dot(p.astype(bf16), wp2, preferred_element_type=f32)
                        + bp2)

    return kernel


def _pad2(a, rows, cols):
    r, c = a.shape
    return jnp.pad(a, ((0, rows - r), (0, cols - c)))


def negnn_forward(z, pos, adj, pool, params):
    """z:(N,) int32, pos:(N,S), adj:(N,N) dense, pool:(G,N). params in PyTorch
    (out,in) conventions. Returns (G,1) f32."""
    (emb, Wpos, bpos, Wcomb, bcomb, Wg1, bg1, Wg2, bg2, Wp1, bp1, Wp2, bp2) = params
    H = emb.shape[1]
    N = z.shape[0]
    S = pos.shape[1]
    G = pool.shape[0]
    L = Wg1.shape[0]
    n_emb = emb.shape[0]
    assert n_emb <= HP and S <= SP and G <= GP

    # ---- One-time parameter preparation (exact linear folding + padding).
    # In a real deployment this happens once at load time, not per call. ----
    Wca_t = Wcomb[:, :H].T                       # atom half of f_combine, (H,H)
    Wcb_t = Wcomb[:, H:].T                       # pos  half of f_combine, (H,H)
    emb_fold = emb @ Wca_t                       # (100,H): emb[z]@Wca == (emb@Wca)[z]
    Wpos_fold = Wpos.T @ Wcb_t                   # (S,H): fold f_pos_embed into combine
    b_fold = bpos @ Wcb_t + bcomb                # (H,)

    # bf16 weight slab; every block starts on a 16-row boundary (bf16 packing).
    pieces = [_pad2(emb_fold, HP, HP),           # rows [0, 128): gather table
              _pad2(Wpos_fold, 16, HP)]          # rows [128, 144): pos weights
    for l in range(L):
        pieces += [_pad2(Wg1[l].T, HP, HP), _pad2(Wg2[l].T, HP, HP)]
    pieces += [_pad2(Wp1.T, HP, HP), _pad2(Wp2.T, HP, HP)]
    wslab = jnp.concatenate(pieces, axis=0).astype(jnp.bfloat16)

    emb_off = 0
    wpos_off = HP
    gin_off = wpos_off + 16
    wp1_off = gin_off + 2 * HP * L
    wp2_off = wp1_off + HP
    r_total = wp2_off + HP
    assert wslab.shape == (r_total, HP), wslab.shape

    # f32 bias rows (bias add / ReLU stay f32 on the VPU, esp. on v5e).
    brows = [_pad2(b_fold[None, :], 1, HP)]
    for l in range(L):
        brows += [_pad2(bg1[l][None, :], 1, HP), _pad2(bg2[l][None, :], 1, HP)]
    brows += [_pad2(bp1[None, :], 1, HP), _pad2(bp2[None, :], 1, HP)]
    bias = _pad2(jnp.concatenate(brows, axis=0), 8, HP).astype(jnp.float32)

    # Graph-side operands: one-hot gather matrix, padded pos, A+I, padded pool.
    onehot = (z[:, None] == jnp.arange(HP, dtype=z.dtype)[None, :]
              ).astype(jnp.bfloat16)                               # (N, 128)
    pos_p = _pad2(pos, N, SP).astype(jnp.bfloat16)                 # (N, 8)
    adji = (adj + jnp.eye(N, dtype=adj.dtype)).astype(jnp.bfloat16)  # (N, N)
    pool_p = _pad2(pool, GP, N).astype(jnp.bfloat16)               # (8, N)

    flops = 2 * (N * HP * HP                       # one-hot gather
                 + N * SP * HP                     # pos matmul
                 + L * (N * N * HP + 2 * N * HP * HP)
                 + GP * N * HP                     # pooling
                 + 2 * GP * HP * HP)               # prediction head
    bytes_accessed = (2 * (N * HP + N * SP + N * N + GP * N + r_total * HP)
                      + 4 * (8 * HP + GP * HP))

    vm = pl.BlockSpec(memory_space=pltpu.MemorySpace.VMEM)

    out_padded = pl.pallas_call(
        make_negnn_kernel(L, emb_off, wpos_off, gin_off, wp1_off, wp2_off),
        out_shape=jax.ShapeDtypeStruct((GP, HP), jnp.float32),
        in_specs=[vm, vm, vm, vm, vm, vm],
        out_specs=vm,
        compiler_params=pltpu.CompilerParams(vmem_limit_bytes=4 * 1024 * 1024),
        cost_estimate=pl.CostEstimate(flops=flops, transcendentals=0,
                                      bytes_accessed=bytes_accessed),
    )(onehot, pos_p, adji, pool_p, wslab, bias)

    return out_padded[:G, :1]                    # row/col padding sliced off


def negnn_reference(z, pos, adj, pool, params):
    """Plain-JAX reference mirroring the PyTorch module (PyTorch (out,in) weights)."""
    (emb, Wpos, bpos, Wcomb, bcomb, Wg1, bg1, Wg2, bg2, Wp1, bp1, Wp2, bp2) = params
    relu = lambda a: jnp.maximum(a, 0.0)
    atom = emb[z]
    pos_e = pos @ Wpos.T + bpos
    x = relu(jnp.concatenate([atom, pos_e], axis=-1) @ Wcomb.T + bcomb)
    L = Wg1.shape[0]
    for l in range(L):
        m = adj @ x + x
        h = relu(m @ Wg1[l].T + bg1[l])
        x = h @ Wg2[l].T + bg2[l]
        if l < L - 1:
            x = relu(x)
    aggr = pool @ x
    p = relu(aggr @ Wp1.T + bp1)
    return p @ Wp2.T + bp2


if __name__ == "__main__":
    # Small, deterministic problem consistent with the module:
    #   hidden_channels=32, num_layers=2, num_spatial_dims=3,
    #   final_embedding_size=None (-> 32), N=16 nodes, 2 graphs.
    N, H, S, L, G = 16, 32, 3, 2, 2
    NUM_ATOM_TYPES = 100

    key = jax.random.PRNGKey(0)
    ks = jax.random.split(key, 20)

    # Graph data
    z = jax.random.randint(ks[0], (N,), 0, NUM_ATOM_TYPES, dtype=jnp.int32)
    pos = jax.random.normal(ks[1], (N, S), dtype=jnp.float32)
    # Deterministic ring + skip edges (directed both ways), edge_index = [src; dst]
    src = jnp.concatenate([jnp.arange(N), (jnp.arange(N) + 1) % N,
                           jnp.arange(N), (jnp.arange(N) + 3) % N])
    dst = jnp.concatenate([(jnp.arange(N) + 1) % N, jnp.arange(N),
                           (jnp.arange(N) + 3) % N, jnp.arange(N)])
    adj = jnp.zeros((N, N), jnp.float32).at[dst, src].add(1.0)  # adj[i, j]: j -> i
    batch = jnp.concatenate([jnp.zeros(N // 2, jnp.int32),
                             jnp.ones(N - N // 2, jnp.int32)])
    pool = (batch[None, :] == jnp.arange(G)[:, None]).astype(jnp.float32)  # (G, N)

    # Deterministic parameters (PyTorch shape conventions: Linear weight is (out, in))
    def w(k, shape):
        return (0.1 * jax.random.normal(k, shape)).astype(jnp.float32)

    emb   = w(ks[2], (NUM_ATOM_TYPES, H))
    Wpos  = w(ks[3], (H, S));       bpos  = w(ks[4], (H,))
    Wcomb = w(ks[5], (H, 2 * H));   bcomb = w(ks[6], (H,))
    Wg1   = w(ks[7], (L, H, H));    bg1   = w(ks[8], (L, H))
    Wg2   = w(ks[9], (L, H, H));    bg2   = w(ks[10], (L, H))
    Wp1   = w(ks[11], (H, H));      bp1   = w(ks[12], (H,))
    Wp2   = w(ks[13], (1, H));      bp2   = w(ks[14], (1,))

    params = (emb, Wpos, bpos, Wcomb, bcomb, Wg1, bg1, Wg2, bg2, Wp1, bp1, Wp2, bp2)

    out = negnn_forward(z, pos, adj, pool, params)
    out = jax.block_until_ready(out)

    ref = negnn_reference(z, pos, adj, pool, params)
    assert out.shape == (G, 1), out.shape
    # Tolerance relaxed vs. the f32 revision: MXU operands are explicitly bf16
    # (f32 accumulation), per the performance review.
    assert jnp.allclose(out, ref, atol=5e-2, rtol=5e-2), (out, ref)

    print("KERNEL_OK")
</pallas_src>

<mosaic_0001>
module attributes {stable_mosaic.version = 11 : i64} {
  func.func @kernel(%arg0: memref<16x128xbf16, #tpu.memory_space<vmem>>, %arg1: memref<16x8xbf16, #tpu.memory_space<vmem>>, %arg2: memref<16x16xbf16, #tpu.memory_space<vmem>>, %arg3: memref<8x16xbf16, #tpu.memory_space<vmem>>, %arg4: memref<912x128xbf16, #tpu.memory_space<vmem>>, %arg5: memref<8x128xf32, #tpu.memory_space<vmem>>, %arg6: memref<8x128xf32, #tpu.memory_space<vmem>>) attributes {dimension_semantics = [], scalar_prefetch = 0 : i64, scratch_operands = 0 : i64, tpu.core_type = #tpu.core_type<tc>} {
    %c0 = arith.constant 0 : index
    %c0_0 = arith.constant 0 : index
    %0 = vector.load %arg0[%c0, %c0_0] : memref<16x128xbf16, #tpu.memory_space<vmem>>, vector<16x128xbf16>
    %c0_1 = arith.constant 0 : index
    %c0_2 = arith.constant 0 : index
    %1 = vector.load %arg4[%c0_1, %c0_2] : memref<912x128xbf16, #tpu.memory_space<vmem>>, vector<128x128xbf16>
    %cst = arith.constant dense<0.000000e+00> : vector<16x128xf32>
    %2 = tpu.matmul %0, %1, %cst {dimension_numbers = #tpu.dot_dimension_numbers<[1], [0], [0], [1], [0, 0, 1, 1], [], []>} : vector<16x128xbf16>, vector<128x128xbf16>, vector<16x128xf32> -> vector<16x128xf32>
    %c0_3 = arith.constant 0 : index
    %c0_4 = arith.constant 0 : index
    %3 = vector.load %arg1[%c0_3, %c0_4] : memref<16x8xbf16, #tpu.memory_space<vmem>>, vector<16x8xbf16>
    %c128 = arith.constant 128 : index
    %c0_5 = arith.constant 0 : index
    %4 = vector.load %arg4[%c128, %c0_5] : memref<912x128xbf16, #tpu.memory_space<vmem>>, vector<8x128xbf16>
    %cst_6 = arith.constant dense<0.000000e+00> : vector<16x128xf32>
    %5 = tpu.matmul %3, %4, %cst_6 {dimension_numbers = #tpu.dot_dimension_numbers<[1], [0], [0], [1], [0, 0, 1, 1], [], []>} : vector<16x8xbf16>, vector<8x128xbf16>, vector<16x128xf32> -> vector<16x128xf32>
    %6 = arith.addf %2, %5 : vector<16x128xf32>
    %c0_7 = arith.constant 0 : index
    %c0_8 = arith.constant 0 : index
    %7 = vector.load %arg5[%c0_7, %c0_8] : memref<8x128xf32, #tpu.memory_space<vmem>>, vector<1x128xf32>
    %8 = vector.broadcast %7 : vector<1x128xf32> to vector<16x128xf32>
    %9 = arith.addf %6, %8 : vector<16x128xf32>
    %cst_9 = arith.constant 0.000000e+00 : f32
    %10 = vector.broadcast %cst_9 : f32 to vector<16x128xf32>
    %11 = arith.maximumf %9, %10 : vector<16x128xf32>
    %c0_10 = arith.constant 0 : index
    %c0_11 = arith.constant 0 : index
    %12 = vector.load %arg2[%c0_10, %c0_11] : memref<16x16xbf16, #tpu.memory_space<vmem>>, vector<16x16xbf16>
    %c144 = arith.constant 144 : index
    %c0_12 = arith.constant 0 : index
    %13 = vector.load %arg4[%c144, %c0_12] : memref<912x128xbf16, #tpu.memory_space<vmem>>, vector<128x128xbf16>
    %c272 = arith.constant 272 : index
    %c0_13 = arith.constant 0 : index
    %14 = vector.load %arg4[%c272, %c0_13] : memref<912x128xbf16, #tpu.memory_space<vmem>>, vector<128x128xbf16>
    %c1 = arith.constant 1 : index
    %c0_14 = arith.constant 0 : index
    %15 = vector.load %arg5[%c1, %c0_14] : memref<8x128xf32, #tpu.memory_space<vmem>>, vector<1x128xf32>
    %c2 = arith.constant 2 : index
    %c0_15 = arith.constant 0 : index
    %16 = vector.load %arg5[%c2, %c0_15] : memref<8x128xf32, #tpu.memory_space<vmem>>, vector<1x128xf32>
    %17 = arith.truncf %11 : vector<16x128xf32> to vector<16x128xbf16>
    %cst_16 = arith.constant dense<0.000000e+00> : vector<16x128xf32>
    %18 = tpu.matmul %12, %17, %cst_16 {dimension_numbers = #tpu.dot_dimension_numbers<[1], [0], [0], [1], [0, 0, 1, 1], [], []>} : vector<16x16xbf16>, vector<16x128xbf16>, vector<16x128xf32> -> vector<16x128xf32>
    %19 = arith.truncf %18 : vector<16x128xf32> to vector<16x128xbf16>
    %cst_17 = arith.constant dense<0.000000e+00> : vector<16x128xf32>
    %20 = tpu.matmul %19, %13, %cst_17 {dimension_numbers = #tpu.dot_dimension_numbers<[1], [0], [0], [1], [0, 0, 1, 1], [], []>} : vector<16x128xbf16>, vector<128x128xbf16>, vector<16x128xf32> -> vector<16x128xf32>
    %21 = vector.broadcast %15 : vector<1x128xf32> to vector<16x128xf32>
    %22 = arith.addf %20, %21 : vector<16x128xf32>
    %cst_18 = arith.constant 0.000000e+00 : f32
    %23 = vector.broadcast %cst_18 : f32 to vector<16x128xf32>
    %24 = arith.maximumf %22, %23 : vector<16x128xf32>
    %25 = arith.truncf %24 : vector<16x128xf32> to vector<16x128xbf16>
    %cst_19 = arith.constant dense<0.000000e+00> : vector<16x128xf32>
    %26 = tpu.matmul %25, %14, %cst_19 {dimension_numbers = #tpu.dot_dimension_numbers<[1], [0], [0], [1], [0, 0, 1, 1], [], []>} : vector<16x128xbf16>, vector<128x128xbf16>, vector<16x128xf32> -> vector<16x128xf32>
    %27 = vector.broadcast %16 : vector<1x128xf32> to vector<16x128xf32>
    %28 = arith.addf %26, %27 : vector<16x128xf32>
    %cst_20 = arith.constant 0.000000e+00 : f32
    %29 = vector.broadcast %cst_20 : f32 to vector<16x128xf32>
    %30 = arith.maximumf %28, %29 : vector<16x128xf32>
    %c400 = arith.constant 400 : index
    %c0_21 = arith.constant 0 : index
    %31 = vector.load %arg4[%c400, %c0_21] : memref<912x128xbf16, #tpu.memory_space<vmem>>, vector<128x128xbf16>
    %c528 = arith.constant 528 : index
    %c0_22 = arith.constant 0 : index
    %32 = vector.load %arg4[%c528, %c0_22] : memref<912x128xbf16, #tpu.memory_space<vmem>>, vector<128x128xbf16>
    %c3 = arith.constant 3 : index
    %c0_23 = arith.constant 0 : index
    %33 = vector.load %arg5[%c3, %c0_23] : memref<8x128xf32, #tpu.memory_space<vmem>>, vector<1x128xf32>
    %c4 = arith.constant 4 : index
    %c0_24 = arith.constant 0 : index
    %34 = vector.load %arg5[%c4, %c0_24] : memref<8x128xf32, #tpu.memory_space<vmem>>, vector<1x128xf32>
    %35 = arith.truncf %30 : vector<16x128xf32> to vector<16x128xbf16>
    %cst_25 = arith.constant dense<0.000000e+00> : vector<16x128xf32>
    %36 = tpu.matmul %12, %35, %cst_25 {dimension_numbers = #tpu.dot_dimension_numbers<[1], [0], [0], [1], [0, 0, 1, 1], [], []>} : vector<16x16xbf16>, vector<16x128xbf16>, vector<16x128xf32> -> vector<16x128xf32>
    %37 = arith.truncf %36 : vector<16x128xf32> to vector<16x128xbf16>
    %cst_26 = arith.constant dense<0.000000e+00> : vector<16x128xf32>
    %38 = tpu.matmul %37, %31, %cst_26 {dimension_numbers = #tpu.dot_dimension_numbers<[1], [0], [0], [1], [0, 0, 1, 1], [], []>} : vector<16x128xbf16>, vector<128x128xbf16>, vector<16x128xf32> -> vector<16x128xf32>
    %39 = vector.broadcast %33 : vector<1x128xf32> to vector<16x128xf32>
    %40 = arith.addf %38, %39 : vector<16x128xf32>
    %cst_27 = arith.constant 0.000000e+00 : f32
    %41 = vector.broadcast %cst_27 : f32 to vector<16x128xf32>
    %42 = arith.maximumf %40, %41 : vector<16x128xf32>
    %43 = arith.truncf %42 : vector<16x128xf32> to vector<16x128xbf16>
    %cst_28 = arith.constant dense<0.000000e+00> : vector<16x128xf32>
    %44 = tpu.matmul %43, %32, %cst_28 {dimension_numbers = #tpu.dot_dimension_numbers<[1], [0], [0], [1], [0, 0, 1, 1], [], []>} : vector<16x128xbf16>, vector<128x128xbf16>, vector<16x128xf32> -> vector<16x128xf32>
    %45 = vector.broadcast %34 : vector<1x128xf32> to vector<16x128xf32>
    %46 = arith.addf %44, %45 : vector<16x128xf32>
    %c0_29 = arith.constant 0 : index
    %c0_30 = arith.constant 0 : index
    %47 = vector.load %arg3[%c0_29, %c0_30] : memref<8x16xbf16, #tpu.memory_space<vmem>>, vector<8x16xbf16>
    %48 = arith.truncf %46 : vector<16x128xf32> to vector<16x128xbf16>
    %cst_31 = arith.constant dense<0.000000e+00> : vector<8x128xf32>
    %49 = tpu.matmul %47, %48, %cst_31 {dimension_numbers = #tpu.dot_dimension_numbers<[1], [0], [0], [1], [0, 0, 1, 1], [], []>} : vector<8x16xbf16>, vector<16x128xbf16>, vector<8x128xf32> -> vector<8x128xf32>
    %c656 = arith.constant 656 : index
    %c0_32 = arith.constant 0 : index
    %50 = vector.load %arg4[%c656, %c0_32] : memref<912x128xbf16, #tpu.memory_space<vmem>>, vector<128x128xbf16>
    %c784 = arith.constant 784 : index
    %c0_33 = arith.constant 0 : index
    %51 = vector.load %arg4[%c784, %c0_33] : memref<912x128xbf16, #tpu.memory_space<vmem>>, vector<128x128xbf16>
    %c5 = arith.constant 5 : index
    %c0_34 = arith.constant 0 : index
    %52 = vector.load %arg5[%c5, %c0_34] : memref<8x128xf32, #tpu.memory_space<vmem>>, vector<1x128xf32>
    %c6 = arith.constant 6 : index
    %c0_35 = arith.constant 0 : index
    %53 = vector.load %arg5[%c6, %c0_35] : memref<8x128xf32, #tpu.memory_space<vmem>>, vector<1x128xf32>
    %54 = arith.truncf %49 : vector<8x128xf32> to vector<8x128xbf16>
    %cst_36 = arith.constant dense<0.000000e+00> : vector<8x128xf32>
    %55 = tpu.matmul %54, %50, %cst_36 {dimension_numbers = #tpu.dot_dimension_numbers<[1], [0], [0], [1], [0, 0, 1, 1], [], []>} : vector<8x128xbf16>, vector<128x128xbf16>, vector<8x128xf32> -> vector<8x128xf32>
    %56 = vector.broadcast %52 : vector<1x128xf32> to vector<8x128xf32>
    %57 = arith.addf %55, %56 : vector<8x128xf32>
    %cst_37 = arith.constant 0.000000e+00 : f32
    %58 = vector.broadcast %cst_37 : f32 to vector<8x128xf32>
    %59 = arith.maximumf %57, %58 : vector<8x128xf32>
    %60 = arith.truncf %59 : vector<8x128xf32> to vector<8x128xbf16>
    %cst_38 = arith.constant dense<0.000000e+00> : vector<8x128xf32>
    %61 = tpu.matmul %60, %51, %cst_38 {dimension_numbers = #tpu.dot_dimension_numbers<[1], [0], [0], [1], [0, 0, 1, 1], [], []>} : vector<8x128xbf16>, vector<128x128xbf16>, vector<8x128xf32> -> vector<8x128xf32>
    %62 = vector.broadcast %53 : vector<1x128xf32> to vector<8x128xf32>
    %63 = arith.addf %61, %62 : vector<8x128xf32>
    %c0_39 = arith.constant 0 : index
    %c0_40 = arith.constant 0 : index
    %64 = vector.load %arg6[%c0_39, %c0_40] : memref<8x128xf32, #tpu.memory_space<vmem>>, vector<8x128xf32>
    tpu.vector_store %arg6[%c0_39, %c0_40], %63 {strides = array<i32>} : memref<8x128xf32, #tpu.memory_space<vmem>>, vector<8x128xf32>,
    return
  }
}

</mosaic_0001>

<llo_original>
// kernel: tpu_custom_call.1
$region0: #{tpu_custom_call.1}
  #allocation0 [shape = 'u32[]', space=smem, size = 0x4, offset = 0x4, fixed_abs, tag = 'smem constant byte address 0x4 - core index']
  #allocation1 [shape = 'u32[144,128]{1,0:T(1,128)}', space=vmem, size = 0x12000, scoped, tag = 'internal scratch']
  %s0 = inlined_call_operand.vmem [shape: bf16[16,128], index: 0, kind: input, shape index: {}]
  %s1 = inlined_call_operand.vmem [shape: bf16[16,8], index: 1, kind: input, shape index: {}]
  %s2 = inlined_call_operand.vmem [shape: bf16[16,16], index: 2, kind: input, shape index: {}]
  %s3 = inlined_call_operand.hbm [shape: bf16[8,16], index: 3, kind: input, shape index: {}]
  %s4 = inlined_call_operand.hbm [shape: bf16[912,128], index: 4, kind: input, shape index: {}]
  %s5 = inlined_call_operand.vmem [shape: f32[8,128], index: 5, kind: input, shape index: {}]
  %s6 = inlined_call_operand.hbm [shape: f32[8,128], index: 6, kind: output, shape index: {}]
  %s7 = sld [smem:[#allocation0]]
  $region42: #{tpu_custom_call.1} parent=0
    _
  %s9 = ssub.s32 1, %s7
  %s10 = scalar_select 0, %s9, %s7
  $region1: #{tpu_custom_call.1} parent=0
    #allocation2 [shape = 'u8[2048]{0}', space=vmem, size = 0x800, scoped, tag = 'input window, operand 3, single buffered']
    #allocation3 [shape = 's32[1]{0}', space=sflag, size = 0x4, scoped, tag = 'scoped memory for tpu_custom_call.1']
    #allocation4 [shape = 's32[1]{0}', space=sflag, size = 0x4, scoped, tag = 'scoped memory for tpu_custom_call.1']
    #allocation5 [shape = 'u8[233472]{0}', space=vmem, size = 0x39000, scoped, tag = 'input window, operand 4, single buffered']
    #allocation6 [shape = 's32[1]{0}', space=sflag, size = 0x4, scoped, tag = 'scoped memory for tpu_custom_call.1']
    #allocation7 [shape = 'u8[4096]{0}', space=vmem, size = 0x1000, scoped, tag = 'output window, operand 0, single buffered']
    %11 = vsyncpa [#allocation3], 0
    %12 = vsyncpa [#allocation6], 0
    %13 = vsyncpa [#allocation4], 0
    // Predicated region
    $region2: #{tpu_custom_call.1} parent=1 // pred_check
      _
    $region3: #{tpu_custom_call.1} parent=1 // pred_check_branch
      %15 = sbr.rel (0) target = $region5
    $region4: #{tpu_custom_call.1} parent=1 // pred_region
      _
    $region5: #{tpu_custom_call.1} parent=1 // pred_fallthru
      _
    // Predicated region
    $region6: #{tpu_custom_call.1} parent=1 // pred_check
      _
    $region7: #{tpu_custom_call.1} parent=1 // pred_check_branch
      %17 = sbr.rel (0) target = $region9
    $region8: #{tpu_custom_call.1} parent=1 // pred_region
      _
    $region9: #{tpu_custom_call.1} parent=1 // pred_fallthru
      _
    // Predicated region
    $region10: #{tpu_custom_call.1} parent=1 // pred_check
      _
    $region11: #{tpu_custom_call.1} parent=1 // pred_check_branch
      %19 = sbr.rel (0) target = $region13
    $region12: #{tpu_custom_call.1} parent=1 // pred_region
      _
    $region13: #{tpu_custom_call.1} parent=1 // pred_fallthru
      _
    // Predicated region
    $region14: #{tpu_custom_call.1} parent=1 // pred_check
      _
    $region15: #{tpu_custom_call.1} parent=1 // pred_check_branch
      %21 = sbr.rel (0) target = $region17
    $region16: #{tpu_custom_call.1} parent=1 // pred_region
      %s23 = ssub.s32 64, 64
      %24 = vsyncadd [#allocation3], %s23
      %s26 = sshll.u32 [#allocation2], 4
      %s27 = int_to_ptr.vmem [resolvable:$true] %s26
      %29 = dma.hbm_to_vmem [thread:$0]  %s3, 64, %s27, [#allocation3]
    $region17: #{tpu_custom_call.1} parent=1 // pred_fallthru
      _
    // Predicated region
    $region18: #{tpu_custom_call.1} parent=1 // pred_check
      _
    $region19: #{tpu_custom_call.1} parent=1 // pred_check_branch
      %31 = sbr.rel (0) target = $region21
    $region20: #{tpu_custom_call.1} parent=1 // pred_region
      %s33 = ssub.s32 7296, 7296
      %34 = vsyncadd [#allocation6], %s33
      %s35 = sshll.u32 [#allocation5], 4
      %s36 = int_to_ptr.vmem [resolvable:$true] %s35
      %41 = dma.hbm_to_vmem [thread:$0]  %s4, 7296, %s36, [#allocation6], 64, 64, 4
    $region21: #{tpu_custom_call.1} parent=1 // pred_fallthru
      _
    // Predicated region
    $region22: #{tpu_custom_call.1} parent=1 // pred_check
      _
    $region23: #{tpu_custom_call.1} parent=1 // pred_check_branch
      %43 = sbr.rel (0) target = $region25
    $region24: #{tpu_custom_call.1} parent=1 // pred_region
      _
    $region25: #{tpu_custom_call.1} parent=1 // pred_fallthru
      _
    // Predicated region
    $region26: #{tpu_custom_call.1} parent=1 // pred_check
      _
    $region27: #{tpu_custom_call.1} parent=1 // pred_check_branch
      %45 = sbr.rel (0) target = $region29
    $region28: #{tpu_custom_call.1} parent=1 // pred_region
      %46 = dma.done [#allocation3], 64
    $region29: #{tpu_custom_call.1} parent=1 // pred_fallthru
      _
    // Predicated region
    $region30: #{tpu_custom_call.1} parent=1 // pred_check
      _
    $region31: #{tpu_custom_call.1} parent=1 // pred_check_branch
      %48 = sbr.rel (0) target = $region33
    $region32: #{tpu_custom_call.1} parent=1 // pred_region
      %49 = dma.done [#allocation6], 7296
    $region33: #{tpu_custom_call.1} parent=1 // pred_fallthru
      _
    %v51 = vld [vmem:[%s0] sm:$0xf]
    %v52 = vld [vmem:[%s0 + $0x4] sm:$0xf]
    %v53 = vld [vmem:[#allocation5] sm:$0xf]
    %v54 = vld [vmem:[#allocation5 + $0x4] sm:$0xf]
    %v55 = vld [vmem:[#allocation5 + $0x8] sm:$0xf]
    %v56 = vld [vmem:[#allocation5 + $0xc] sm:$0xf]
    %v57 = vld [vmem:[#allocation5 + $0x10] sm:$0xf]
    %v58 = vld [vmem:[#allocation5 + $0x14] sm:$0xf]
    %v59 = vld [vmem:[#allocation5 + $0x18] sm:$0xf]
    %v60 = vld [vmem:[#allocation5 + $0x1c] sm:$0xf]
    %v61 = vld [vmem:[#allocation5 + $0x20] sm:$0xf]
    %v62 = vld [vmem:[#allocation5 + $0x24] sm:$0xf]
    %v63 = vld [vmem:[#allocation5 + $0x28] sm:$0xf]
    %v64 = vld [vmem:[#allocation5 + $0x2c] sm:$0xf]
    %v65 = vld [vmem:[#allocation5 + $0x30] sm:$0xf]
    %v66 = vld [vmem:[#allocation5 + $0x34] sm:$0xf]
    %v67 = vld [vmem:[#allocation5 + $0x38] sm:$0xf]
    %v68 = vld [vmem:[#allocation5 + $0x3c] sm:$0xf]
    %v69 = vld [vmem:[%s1] sm:$0xf]
    %v70 = vld [vmem:[%s1 + $0x4] sm:$0xf]
    %v71 = vld [vmem:[#allocation5 + $0x40] sm:$0xf]
    %v74 = vunpack.c.l.b16 %v69
    %v75 = vunpack.c.l.b16 %v70
    %v76 = vpack.c.b16 %v75, %v74
    %vm77 = vcmask 64512
    %v79 = vsel %vm77, %v76, 0
    %vm81 = vcmask 1043456
    %v83 = vsel %vm81, %v71, 0
    %85 = vmatprep.subr.bf16.mxu0 0
    %86 = vmatpush1.bf16.msra.mxu0 %v83
    %87 = vmatprep.subr.bf16.mxu0 0
    %88 = vmatpush1.bf16.msra.mxu0 0
    %89 = vmatprep.subr.bf16.mxu0 0
    %90 = vmatpush1.bf16.msra.mxu0 0
    %91 = vmatprep.subr.bf16.mxu0 0
    %92 = vmatpush1.bf16.msra.mxu0 0
    %93 = vmatprep.subr.bf16.mxu0 0
    %94 = vmatpush1.bf16.msra.mxu0 0
    %95 = vmatprep.subr.bf16.mxu0 0
    %96 = vmatpush1.bf16.msra.mxu0 0
    %97 = vmatprep.subr.bf16.mxu0 0
    %98 = vmatpush1.bf16.msra.mxu0 0
    %99 = vmatprep.subr.bf16.mxu0 0
    %100 = vmatpush1.bf16.msra.mxu0 0
    %101 = vmatprep.subr.bf16.mxu0 0
    %102 = vmatpush1.bf16.msra.mxu0 0
    %103 = vmatprep.subr.bf16.mxu0 0
    %104 = vmatpush1.bf16.msra.mxu0 0
    %105 = vmatprep.subr.bf16.mxu0 0
    %106 = vmatpush1.bf16.msra.mxu0 0
    %107 = vmatprep.subr.bf16.mxu0 0
    %108 = vmatpush1.bf16.msra.mxu0 0
    %109 = vmatprep.subr.bf16.mxu0 0
    %110 = vmatpush1.bf16.msra.mxu0 0
    %111 = vmatprep.subr.bf16.mxu0 0
    %112 = vmatpush1.bf16.msra.mxu0 0
    %113 = vmatprep.subr.bf16.mxu0 0
    %114 = vmatpush1.bf16.msra.mxu0 0
    %115 = vmatprep.subr.bf16.mxu0 0
    %116 = vmatpush1.bf16.msra.mxu0 0
    %117 = vmatprep.mubr.bf16.mxu0 0
    %118 = vmatmul.mubr.bf16.gmra.mrb[0].mxu0 %v79
    %v119 = vpop.f32.mrb[0].mxu0
    %v120 = vadd.f32 0.0, %v119
    %v121 = vpop.f32.mrb[0].mxu0
    %v122 = vpop.f32.mrb[0].mxu0
    %v123 = vadd.f32 0.0, %v122
    %v124 = vpop.f32.mrb[0].mxu0
    %125 = vdwg.mxu0
    %v128 = vunpack.c.l.b16 %v51
    %v129 = vunpack.c.l.b16 %v52
    %v130 = vpack.c.b16 %v129, %v128
    %v148 = vunpack.c.l.b16 %v53
    %v149 = vunpack.c.l.b16 %v54
    %v150 = vunpack.c.l.b16 %v55
    %v151 = vunpack.c.l.b16 %v56
    %v152 = vunpack.c.l.b16 %v57
    %v153 = vunpack.c.l.b16 %v58
    %v154 = vunpack.c.l.b16 %v59
    %v155 = vunpack.c.l.b16 %v60
    %v156 = vunpack.c.l.b16 %v61
    %v157 = vunpack.c.l.b16 %v62
    %v158 = vunpack.c.l.b16 %v63
    %v159 = vunpack.c.l.b16 %v64
    %v160 = vunpack.c.l.b16 %v65
    %v161 = vunpack.c.l.b16 %v66
    %v162 = vunpack.c.l.b16 %v67
    %v163 = vunpack.c.l.b16 %v68
    %v164 = vpack.c.b16 %v149, %v148
    %v165 = vpack.c.b16 %v151, %v150
    %v166 = vpack.c.b16 %v153, %v152
    %v167 = vpack.c.b16 %v155, %v154
    %v168 = vpack.c.b16 %v157, %v156
    %v169 = vpack.c.b16 %v159, %v158
    %v170 = vpack.c.b16 %v161, %v160
    %v171 = vpack.c.b16 %v163, %v162
    %180 = vmatprep.subr.bf16.mxu0 0
    %181 = vmatpush1.bf16.msra.mxu0 %v164
    %182 = vmatprep.subr.bf16.mxu0 0
    %183 = vmatpush1.bf16.msra.mxu0 %v165
    %184 = vmatprep.subr.bf16.mxu0 0
    %185 = vmatpush1.bf16.msra.mxu0 %v166
    %186 = vmatprep.subr.bf16.mxu0 0
    %187 = vmatpush1.bf16.msra.mxu0 %v167
    %188 = vmatprep.subr.bf16.mxu0 0
    %189 = vmatpush1.bf16.msra.mxu0 %v168
    %190 = vmatprep.subr.bf16.mxu0 0
    %191 = vmatpush1.bf16.msra.mxu0 %v169
    %192 = vmatprep.subr.bf16.mxu0 0
    %193 = vmatpush1.bf16.msra.mxu0 %v170
    %194 = vmatprep.subr.bf16.mxu0 0
    %195 = vmatpush1.bf16.msra.mxu0 %v171
    %196 = vmatprep.subr.bf16.mxu0 0
    %197 = vmatpush1.bf16.msra.mxu0 0
    %198 = vmatprep.subr.bf16.mxu0 0
    %199 = vmatpush1.bf16.msra.mxu0 0
    %200 = vmatprep.subr.bf16.mxu0 0
    %201 = vmatpush1.bf16.msra.mxu0 0
    %202 = vmatprep.subr.bf16.mxu0 0
    %203 = vmatpush1.bf16.msra.mxu0 0
    %204 = vmatprep.subr.bf16.mxu0 0
    %205 = vmatpush1.bf16.msra.mxu0 0
    %206 = vmatprep.subr.bf16.mxu0 0
    %207 = vmatpush1.bf16.msra.mxu0 0
    %208 = vmatprep.subr.bf16.mxu0 0
    %209 = vmatpush1.bf16.msra.mxu0 0
    %210 = vmatprep.subr.bf16.mxu0 0
    %211 = vmatpush1.bf16.msra.mxu0 0
    %212 = vmatprep.mubr.bf16.mxu0 0
    %213 = vmatmul.mubr.bf16.gmra.mrb[0].mxu0 %v130
    %v214 = vpop.f32.mrb[0].mxu0
    %v215 = vadd.f32 %v120, %v214
    %v216 = vpop.f32.mrb[0].mxu0
    %v217 = vpop.f32.mrb[0].mxu0
    %v218 = vadd.f32 %v123, %v217
    %v219 = vpop.f32.mrb[0].mxu0
    %220 = vdwg.mxu0
    %v221 = vld [vmem:[%s5] sm:$0x1]
    %v222 = vlaneseq
    %v223 = vshrl.u32 %v222, 7
    %v224 = vsub.s32 0, %v223
    %v225 = vrot.slane %v221, %v224
    %v226 = vadd.f32 %v215, %v225
    %v227 = vadd.f32 %v218, %v225
    %v228 = vmax.f32 %v226, 0.0
    %v229 = vmax.f32 %v227, 0.0
    %v230 = vld [vmem:[%s2] sm:$0xf]
    %v231 = vld [vmem:[%s2 + $0x4] sm:$0xf]
    %v232 = vld [vmem:[#allocation5 + $0x48] sm:$0xf]
    %v233 = vld [vmem:[#allocation5 + $0x4c] sm:$0xf]
    %v234 = vld [vmem:[#allocation5 + $0x50] sm:$0xf]
    %v235 = vld [vmem:[#allocation5 + $0x54] sm:$0xf]
    %v236 = vld [vmem:[#allocation5 + $0x58] sm:$0xf]
    %v237 = vld [vmem:[#allocation5 + $0x5c] sm:$0xf]
    %v238 = vld [vmem:[#allocation5 + $0x60] sm:$0xf]
    %v239 = vld [vmem:[#allocation5 + $0x64] sm:$0xf]
    %v240 = vld [vmem:[#allocation5 + $0x68] sm:$0xf]
    %v241 = vld [vmem:[#allocation5 + $0x6c] sm:$0xf]
    %v242 = vld [vmem:[#allocation5 + $0x70] sm:$0xf]
    %v243 = vld [vmem:[#allocation5 + $0x74] sm:$0xf]
    %v244 = vld [vmem:[#allocation5 + $0x78] sm:$0xf]
    %v245 = vld [vmem:[#allocation5 + $0x7c] sm:$0xf]
    %v246 = vld [vmem:[#allocation5 + $0x80] sm:$0xf]
    %v247 = vld [vmem:[#allocation5 + $0x84] sm:$0xf]
    %v248 = vld [vmem:[#allocation5 + $0x88] sm:$0xf]
    %v249 = vld [vmem:[#allocation5 + $0x8c] sm:$0xf]
    %v250 = vld [vmem:[#allocation5 + $0x90] sm:$0xf]
    %v251 = vld [vmem:[#allocation5 + $0x94] sm:$0xf]
    %v252 = vld [vmem:[#allocation5 + $0x98] sm:$0xf]
    %v253 = vld [vmem:[#allocation5 + $0x9c] sm:$0xf]
    %v254 = vld [vmem:[#allocation5 + $0xa0] sm:$0xf]
    %v255 = vld [vmem:[#allocation5 + $0xa4] sm:$0xf]
    %v256 = vld [vmem:[#allocation5 + $0xa8] sm:$0xf]
    %v257 = vld [vmem:[#allocation5 + $0xac] sm:$0xf]
    %v258 = vld [vmem:[#allocation5 + $0xb0] sm:$0xf]
    %v259 = vld [vmem:[#allocation5 + $0xb4] sm:$0xf]
    %v260 = vld [vmem:[#allocation5 + $0xb8] sm:$0xf]
    %v261 = vld [vmem:[#allocation5 + $0xbc] sm:$0xf]
    %v262 = vld [vmem:[#allocation5 + $0xc0] sm:$0xf]
    %v263 = vld [vmem:[#allocation5 + $0xc4] sm:$0xf]
    %v264 = vld [vmem:[%s5 + $0x1] sm:$0x1]
    %v265 = vld [vmem:[%s5 + $0x2] sm:$0x1]
    %v266 = vpack.c.bf16 %v229, %v228
    %v269 = vunpack.c.l.b16 %v230
    %v270 = vunpack.c.l.b16 %v231
    %v271 = vpack.c.b16 %v270, %v269
    %vm272 = vcmask 130048
    %v274 = vsel %vm272, %v271, 0
    %276 = vmatprep.subr.bf16.mxu0 0
    %277 = vmatpush1.bf16.msra.mxu0 %v266
    %278 = vmatprep.subr.bf16.mxu0 0
    %279 = vmatpush1.bf16.msra.mxu0 0
    %280 = vmatprep.subr.bf16.mxu0 0
    %281 = vmatpush1.bf16.msra.mxu0 0
    %282 = vmatprep.subr.bf16.mxu0 0
    %283 = vmatpush1.bf16.msra.mxu0 0
    %284 = vmatprep.subr.bf16.mxu0 0
    %285 = vmatpush1.bf16.msra.mxu0 0
    %286 = vmatprep.subr.bf16.mxu0 0
    %287 = vmatpush1.bf16.msra.mxu0 0
    %288 = vmatprep.subr.bf16.mxu0 0
    %289 = vmatpush1.bf16.msra.mxu0 0
    %290 = vmatprep.subr.bf16.mxu0 0
    %291 = vmatpush1.bf16.msra.mxu0 0
    %292 = vmatprep.subr.bf16.mxu0 0
    %293 = vmatpush1.bf16.msra.mxu0 0
    %294 = vmatprep.subr.bf16.mxu0 0
    %295 = vmatpush1.bf16.msra.mxu0 0
    %296 = vmatprep.subr.bf16.mxu0 0
    %297 = vmatpush1.bf16.msra.mxu0 0
    %298 = vmatprep.subr.bf16.mxu0 0
    %299 = vmatpush1.bf16.msra.mxu0 0
    %300 = vmatprep.subr.bf16.mxu0 0
    %301 = vmatpush1.bf16.msra.mxu0 0
    %302 = vmatprep.subr.bf16.mxu0 0
    %303 = vmatpush1.bf16.msra.mxu0 0
    %304 = vmatprep.subr.bf16.mxu0 0
    %305 = vmatpush1.bf16.msra.mxu0 0
    %306 = vmatprep.subr.bf16.mxu0 0
    %307 = vmatpush1.bf16.msra.mxu0 0
    %308 = vmatprep.mubr.bf16.mxu0 0
    %309 = vmatmul.mubr.bf16.gmra.mrb[0].mxu0 %v274
    %v310 = vpop.f32.mrb[0].mxu0
    %v311 = vadd.f32 0.0, %v310
    %v312 = vpop.f32.mrb[0].mxu0
    %v313 = vpop.f32.mrb[0].mxu0
    %v314 = vadd.f32 0.0, %v313
    %v315 = vpop.f32.mrb[0].mxu0
    %316 = vdwg.mxu0
    %v317 = vpack.c.bf16 %v314, %v311
    %v318 = vlaneseq
    %v319 = vshrl.u32 %v318, 7
    %v320 = vsub.s32 0, %v319
    %v321 = vrot.slane %v264, %v320
    %v338 = vunpack.c.l.b16 %v232
    %v339 = vunpack.c.l.b16 %v233
    %v340 = vunpack.c.l.b16 %v234
    %v341 = vunpack.c.l.b16 %v235
    %v342 = vunpack.c.l.b16 %v236
    %v343 = vunpack.c.l.b16 %v237
    %v344 = vunpack.c.l.b16 %v238
    %v345 = vunpack.c.l.b16 %v239
    %v346 = vunpack.c.l.b16 %v240
    %v347 = vunpack.c.l.b16 %v241
    %v348 = vunpack.c.l.b16 %v242
    %v349 = vunpack.c.l.b16 %v243
    %v350 = vunpack.c.l.b16 %v244
    %v351 = vunpack.c.l.b16 %v245
    %v352 = vunpack.c.l.b16 %v246
    %v353 = vunpack.c.l.b16 %v247
    %v354 = vpack.c.b16 %v339, %v338
    %v355 = vpack.c.b16 %v341, %v340
    %v356 = vpack.c.b16 %v343, %v342
    %v357 = vpack.c.b16 %v345, %v344
    %v358 = vpack.c.b16 %v347, %v346
    %v359 = vpack.c.b16 %v349, %v348
    %v360 = vpack.c.b16 %v351, %v350
    %v361 = vpack.c.b16 %v353, %v352
    %370 = vmatprep.subr.bf16.mxu0 0
    %371 = vmatpush1.bf16.msra.mxu0 %v354
    %372 = vmatprep.subr.bf16.mxu0 0
    %373 = vmatpush1.bf16.msra.mxu0 %v355
    %374 = vmatprep.subr.bf16.mxu0 0
    %375 = vmatpush1.bf16.msra.mxu0 %v356
    %376 = vmatprep.subr.bf16.mxu0 0
    %377 = vmatpush1.bf16.msra.mxu0 %v357
    %378 = vmatprep.subr.bf16.mxu0 0
    %379 = vmatpush1.bf16.msra.mxu0 %v358
    %380 = vmatprep.subr.bf16.mxu0 0
    %381 = vmatpush1.bf16.msra.mxu0 %v359
    %382 = vmatprep.subr.bf16.mxu0 0
    %383 = vmatpush1.bf16.msra.mxu0 %v360
    %384 = vmatprep.subr.bf16.mxu0 0
    %385 = vmatpush1.bf16.msra.mxu0 %v361
    %386 = vmatprep.subr.bf16.mxu0 0
    %387 = vmatpush1.bf16.msra.mxu0 0
    %388 = vmatprep.subr.bf16.mxu0 0
    %389 = vmatpush1.bf16.msra.mxu0 0
    %390 = vmatprep.subr.bf16.mxu0 0
    %391 = vmatpush1.bf16.msra.mxu0 0
    %392 = vmatprep.subr.bf16.mxu0 0
    %393 = vmatpush1.bf16.msra.mxu0 0
    %394 = vmatprep.subr.bf16.mxu0 0
    %395 = vmatpush1.bf16.msra.mxu0 0
    %396 = vmatprep.subr.bf16.mxu0 0
    %397 = vmatpush1.bf16.msra.mxu0 0
    %398 = vmatprep.subr.bf16.mxu0 0
    %399 = vmatpush1.bf16.msra.mxu0 0
    %400 = vmatprep.subr.bf16.mxu0 0
    %401 = vmatpush1.bf16.msra.mxu0 0
    %402 = vmatprep.mubr.bf16.mxu0 0
    %403 = vmatmul.mubr.bf16.gmra.mrb[0].mxu0 %v317
    %v404 = vpop.f32.mrb[0].mxu0
    %v405 = vadd.f32 %v321, %v404
    %v406 = vpop.f32.mrb[0].mxu0
    %v407 = vpop.f32.mrb[0].mxu0
    %v408 = vadd.f32 %v321, %v407
    %v409 = vpop.f32.mrb[0].mxu0
    %410 = vdwg.mxu0
    %v411 = vmax.f32 %v405, 0.0
    %v412 = vmax.f32 %v408, 0.0
    %v413 = vpack.c.bf16 %v412, %v411
    %v414 = vlaneseq
    %v415 = vshrl.u32 %v414, 7
    %v416 = vsub.s32 0, %v415
    %v417 = vrot.slane %v265, %v416
    %v434 = vunpack.c.l.b16 %v248
    %v435 = vunpack.c.l.b16 %v249
    %v436 = vunpack.c.l.b16 %v250
    %v437 = vunpack.c.l.b16 %v251
    %v438 = vunpack.c.l.b16 %v252
    %v439 = vunpack.c.l.b16 %v253
    %v440 = vunpack.c.l.b16 %v254
    %v441 = vunpack.c.l.b16 %v255
    %v442 = vunpack.c.l.b16 %v256
    %v443 = vunpack.c.l.b16 %v257
    %v444 = vunpack.c.l.b16 %v258
    %v445 = vunpack.c.l.b16 %v259
    %v446 = vunpack.c.l.b16 %v260
    %v447 = vunpack.c.l.b16 %v261
    %v448 = vunpack.c.l.b16 %v262
    %v449 = vunpack.c.l.b16 %v263
    %v450 = vpack.c.b16 %v435, %v434
    %v451 = vpack.c.b16 %v437, %v436
    %v452 = vpack.c.b16 %v439, %v438
    %v453 = vpack.c.b16 %v441, %v440
    %v454 = vpack.c.b16 %v443, %v442
    %v455 = vpack.c.b16 %v445, %v444
    %v456 = vpack.c.b16 %v447, %v446
    %v457 = vpack.c.b16 %v449, %v448
    %466 = vmatprep.subr.bf16.mxu0 0
    %467 = vmatpush1.bf16.msra.mxu0 %v450
    %468 = vmatprep.subr.bf16.mxu0 0
    %469 = vmatpush1.bf16.msra.mxu0 %v451
    %470 = vmatprep.subr.bf16.mxu0 0
    %471 = vmatpush1.bf16.msra.mxu0 %v452
    %472 = vmatprep.subr.bf16.mxu0 0
    %473 = vmatpush1.bf16.msra.mxu0 %v453
    %474 = vmatprep.subr.bf16.mxu0 0
    %475 = vmatpush1.bf16.msra.mxu0 %v454
    %476 = vmatprep.subr.bf16.mxu0 0
    %477 = vmatpush1.bf16.msra.mxu0 %v455
    %478 = vmatprep.subr.bf16.mxu0 0
    %479 = vmatpush1.bf16.msra.mxu0 %v456
    %480 = vmatprep.subr.bf16.mxu0 0
    %481 = vmatpush1.bf16.msra.mxu0 %v457
    %482 = vmatprep.subr.bf16.mxu0 0
    %483 = vmatpush1.bf16.msra.mxu0 0
    %484 = vmatprep.subr.bf16.mxu0 0
    %485 = vmatpush1.bf16.msra.mxu0 0
    %486 = vmatprep.subr.bf16.mxu0 0
    %487 = vmatpush1.bf16.msra.mxu0 0
    %488 = vmatprep.subr.bf16.mxu0 0
    %489 = vmatpush1.bf16.msra.mxu0 0
    %490 = vmatprep.subr.bf16.mxu0 0
    %491 = vmatpush1.bf16.msra.mxu0 0
    %492 = vmatprep.subr.bf16.mxu0 0
    %493 = vmatpush1.bf16.msra.mxu0 0
    %494 = vmatprep.subr.bf16.mxu0 0
    %495 = vmatpush1.bf16.msra.mxu0 0
    %496 = vmatprep.subr.bf16.mxu0 0
    %497 = vmatpush1.bf16.msra.mxu0 0
    %498 = vmatprep.mubr.bf16.mxu0 0
    %499 = vmatmul.mubr.bf16.gmra.mrb[0].mxu0 %v413
    %v500 = vpop.f32.mrb[0].mxu0
    %v501 = vadd.f32 %v417, %v500
    %v502 = vpop.f32.mrb[0].mxu0
    %v503 = vpop.f32.mrb[0].mxu0
    %v504 = vadd.f32 %v417, %v503
    %v505 = vpop.f32.mrb[0].mxu0
    %506 = vdwg.mxu0
    %v507 = vmax.f32 %v501, 0.0
    %v508 = vmax.f32 %v504, 0.0
    %v509 = vld [vmem:[#allocation5 + $0xc8] sm:$0xf]
    %v510 = vld [vmem:[#allocation5 + $0xcc] sm:$0xf]
    %v511 = vld [vmem:[#allocation5 + $0xd0] sm:$0xf]
    %v512 = vld [vmem:[#allocation5 + $0xd4] sm:$0xf]
    %v513 = vld [vmem:[#allocation5 + $0xd8] sm:$0xf]
    %v514 = vld [vmem:[#allocation5 + $0xdc] sm:$0xf]
    %v515 = vld [vmem:[#allocation5 + $0xe0] sm:$0xf]
    %v516 = vld [vmem:[#allocation5 + $0xe4] sm:$0xf]
    %v517 = vld [vmem:[#allocation5 + $0xe8] sm:$0xf]
    %v518 = vld [vmem:[#allocation5 + $0xec] sm:$0xf]
    %v519 = vld [vmem:[#allocation5 + $0xf0] sm:$0xf]
    %v520 = vld [vmem:[#allocation5 + $0xf4] sm:$0xf]
    %v521 = vld [vmem:[#allocation5 + $0xf8] sm:$0xf]
    %v522 = vld [vmem:[#allocation5 + $0xfc] sm:$0xf]
    %v523 = vld [vmem:[#allocation5 + $0x100] sm:$0xf]
    %v524 = vld [vmem:[#allocation5 + $0x104] sm:$0xf]
    %v525 = vld [vmem:[#allocation5 + $0x108] sm:$0xf]
    %v526 = vld [vmem:[#allocation5 + $0x10c] sm:$0xf]
    %v527 = vld [vmem:[#allocation5 + $0x110] sm:$0xf]
    %v528 = vld [vmem:[#allocation5 + $0x114] sm:$0xf]
    %v529 = vld [vmem:[#allocation5 + $0x118] sm:$0xf]
    %v530 = vld [vmem:[#allocation5 + $0x11c] sm:$0xf]
    %v531 = vld [vmem:[#allocation5 + $0x120] sm:$0xf]
    %v532 = vld [vmem:[#allocation5 + $0x124] sm:$0xf]
    %v533 = vld [vmem:[#allocation5 + $0x128] sm:$0xf]
    %v534 = vld [vmem:[#allocation5 + $0x12c] sm:$0xf]
    %v535 = vld [vmem:[#allocation5 + $0x130] sm:$0xf]
    %v536 = vld [vmem:[#allocation5 + $0x134] sm:$0xf]
    %v537 = vld [vmem:[#allocation5 + $0x138] sm:$0xf]
    %v538 = vld [vmem:[#allocation5 + $0x13c] sm:$0xf]
    %v539 = vld [vmem:[#allocation5 + $0x140] sm:$0xf]
    %v540 = vld [vmem:[#allocation5 + $0x144] sm:$0xf]
    %v541 = vld [vmem:[%s5 + $0x3] sm:$0x1]
    %v542 = vld [vmem:[%s5 + $0x4] sm:$0x1]
    %v543 = vpack.c.bf16 %v508, %v507
    %544 = vmatprep.subr.bf16.mxu0 0
    %545 = vmatpush1.bf16.msra.mxu0 %v543
    %546 = vmatprep.subr.bf16.mxu0 0
    %547 = vmatpush1.bf16.msra.mxu0 0
    %548 = vmatprep.subr.bf16.mxu0 0
    %549 = vmatpush1.bf16.msra.mxu0 0
    %550 = vmatprep.subr.bf16.mxu0 0
    %551 = vmatpush1.bf16.msra.mxu0 0
    %552 = vmatprep.subr.bf16.mxu0 0
    %553 = vmatpush1.bf16.msra.mxu0 0
    %554 = vmatprep.subr.bf16.mxu0 0
    %555 = vmatpush1.bf16.msra.mxu0 0
    %556 = vmatprep.subr.bf16.mxu0 0
    %557 = vmatpush1.bf16.msra.mxu0 0
    %558 = vmatprep.subr.bf16.mxu0 0
    %559 = vmatpush1.bf16.msra.mxu0 0
    %560 = vmatprep.subr.bf16.mxu0 0
    %561 = vmatpush1.bf16.msra.mxu0 0
    %562 = vmatprep.subr.bf16.mxu0 0
    %563 = vmatpush1.bf16.msra.mxu0 0
    %564 = vmatprep.subr.bf16.mxu0 0
    %565 = vmatpush1.bf16.msra.mxu0 0
    %566 = vmatprep.subr.bf16.mxu0 0
    %567 = vmatpush1.bf16.msra.mxu0 0
    %568 = vmatprep.subr.bf16.mxu0 0
    %569 = vmatpush1.bf16.msra.mxu0 0
    %570 = vmatprep.subr.bf16.mxu0 0
    %571 = vmatpush1.bf16.msra.mxu0 0
    %572 = vmatprep.subr.bf16.mxu0 0
    %573 = vmatpush1.bf16.msra.mxu0 0
    %574 = vmatprep.subr.bf16.mxu0 0
    %575 = vmatpush1.bf16.msra.mxu0 0
    %576 = vmatprep.mubr.bf16.mxu0 0
    %577 = vmatmul.mubr.bf16.gmra.mrb[0].mxu0 %v274
    %v578 = vpop.f32.mrb[0].mxu0
    %v579 = vadd.f32 0.0, %v578
    %v580 = vpop.f32.mrb[0].mxu0
    %v581 = vpop.f32.mrb[0].mxu0
    %v582 = vadd.f32 0.0, %v581
    %v583 = vpop.f32.mrb[0].mxu0
    %584 = vdwg.mxu0
    %v585 = vpack.c.bf16 %v582, %v579
    %v586 = vlaneseq
    %v587 = vshrl.u32 %v586, 7
    %v588 = vsub.s32 0, %v587
    %v589 = vrot.slane %v541, %v588
    %v606 = vunpack.c.l.b16 %v509
    %v607 = vunpack.c.l.b16 %v510
    %v608 = vunpack.c.l.b16 %v511
    %v609 = vunpack.c.l.b16 %v512
    %v610 = vunpack.c.l.b16 %v513
    %v611 = vunpack.c.l.b16 %v514
    %v612 = vunpack.c.l.b16 %v515
    %v613 = vunpack.c.l.b16 %v516
    %v614 = vunpack.c.l.b16 %v517
    %v615 = vunpack.c.l.b16 %v518
    %v616 = vunpack.c.l.b16 %v519
    %v617 = vunpack.c.l.b16 %v520
    %v618 = vunpack.c.l.b16 %v521
    %v619 = vunpack.c.l.b16 %v522
    %v620 = vunpack.c.l.b16 %v523
    %v621 = vunpack.c.l.b16 %v524
    %v622 = vpack.c.b16 %v607, %v606
    %v623 = vpack.c.b16 %v609, %v608
    %v624 = vpack.c.b16 %v611, %v610
    %v625 = vpack.c.b16 %v613, %v612
    %v626 = vpack.c.b16 %v615, %v614
    %v627 = vpack.c.b16 %v617, %v616
    %v628 = vpack.c.b16 %v619, %v618
    %v629 = vpack.c.b16 %v621, %v620
    %638 = vmatprep.subr.bf16.mxu0 0
    %639 = vmatpush1.bf16.msra.mxu0 %v622
    %640 = vmatprep.subr.bf16.mxu0 0
    %641 = vmatpush1.bf16.msra.mxu0 %v623
    %642 = vmatprep.subr.bf16.mxu0 0
    %643 = vmatpush1.bf16.msra.mxu0 %v624
    %644 = vmatprep.subr.bf16.mxu0 0
    %645 = vmatpush1.bf16.msra.mxu0 %v625
    %646 = vmatprep.subr.bf16.mxu0 0
    %647 = vmatpush1.bf16.msra.mxu0 %v626
    %648 = vmatprep.subr.bf16.mxu0 0
    %649 = vmatpush1.bf16.msra.mxu0 %v627
    %650 = vmatprep.subr.bf16.mxu0 0
    %651 = vmatpush1.bf16.msra.mxu0 %v628
    %652 = vmatprep.subr.bf16.mxu0 0
    %653 = vmatpush1.bf16.msra.mxu0 %v629
    %654 = vmatprep.subr.bf16.mxu0 0
    %655 = vmatpush1.bf16.msra.mxu0 0
    %656 = vmatprep.subr.bf16.mxu0 0
    %657 = vmatpush1.bf16.msra.mxu0 0
    %658 = vmatprep.subr.bf16.mxu0 0
    %659 = vmatpush1.bf16.msra.mxu0 0
    %660 = vmatprep.subr.bf16.mxu0 0
    %661 = vmatpush1.bf16.msra.mxu0 0
    %662 = vmatprep.subr.bf16.mxu0 0
    %663 = vmatpush1.bf16.msra.mxu0 0
    %664 = vmatprep.subr.bf16.mxu0 0
    %665 = vmatpush1.bf16.msra.mxu0 0
    %666 = vmatprep.subr.bf16.mxu0 0
    %667 = vmatpush1.bf16.msra.mxu0 0
    %668 = vmatprep.subr.bf16.mxu0 0
    %669 = vmatpush1.bf16.msra.mxu0 0
    %670 = vmatprep.mubr.bf16.mxu0 0
    %671 = vmatmul.mubr.bf16.gmra.mrb[0].mxu0 %v585
    %v672 = vpop.f32.mrb[0].mxu0
    %v673 = vadd.f32 %v589, %v672
    %v674 = vpop.f32.mrb[0].mxu0
    %v675 = vpop.f32.mrb[0].mxu0
    %v676 = vadd.f32 %v589, %v675
    %v677 = vpop.f32.mrb[0].mxu0
    %678 = vdwg.mxu0
    %v679 = vmax.f32 %v673, 0.0
    %v680 = vmax.f32 %v676, 0.0
    %v681 = vpack.c.bf16 %v680, %v679
    %v682 = vlaneseq
    %v683 = vshrl.u32 %v682, 7
    %v684 = vsub.s32 0, %v683
    %v685 = vrot.slane %v542, %v684
    %v702 = vunpack.c.l.b16 %v525
    %v703 = vunpack.c.l.b16 %v526
    %v704 = vunpack.c.l.b16 %v527
    %v705 = vunpack.c.l.b16 %v528
    %v706 = vunpack.c.l.b16 %v529
    %v707 = vunpack.c.l.b16 %v530
    %v708 = vunpack.c.l.b16 %v531
    %v709 = vunpack.c.l.b16 %v532
    %v710 = vunpack.c.l.b16 %v533
    %v711 = vunpack.c.l.b16 %v534
    %v712 = vunpack.c.l.b16 %v535
    %v713 = vunpack.c.l.b16 %v536
    %v714 = vunpack.c.l.b16 %v537
    %v715 = vunpack.c.l.b16 %v538
    %v716 = vunpack.c.l.b16 %v539
    %v717 = vunpack.c.l.b16 %v540
    %v718 = vpack.c.b16 %v703, %v702
    %v719 = vpack.c.b16 %v705, %v704
    %v720 = vpack.c.b16 %v707, %v706
    %v721 = vpack.c.b16 %v709, %v708
    %v722 = vpack.c.b16 %v711, %v710
    %v723 = vpack.c.b16 %v713, %v712
    %v724 = vpack.c.b16 %v715, %v714
    %v725 = vpack.c.b16 %v717, %v716
    %734 = vmatprep.subr.bf16.mxu0 0
    %735 = vmatpush1.bf16.msra.mxu0 %v718
    %736 = vmatprep.subr.bf16.mxu0 0
    %737 = vmatpush1.bf16.msra.mxu0 %v719
    %738 = vmatprep.subr.bf16.mxu0 0
    %739 = vmatpush1.bf16.msra.mxu0 %v720
    %740 = vmatprep.subr.bf16.mxu0 0
    %741 = vmatpush1.bf16.msra.mxu0 %v721
    %742 = vmatprep.subr.bf16.mxu0 0
    %743 = vmatpush1.bf16.msra.mxu0 %v722
    %744 = vmatprep.subr.bf16.mxu0 0
    %745 = vmatpush1.bf16.msra.mxu0 %v723
    %746 = vmatprep.subr.bf16.mxu0 0
    %747 = vmatpush1.bf16.msra.mxu0 %v724
    %748 = vmatprep.subr.bf16.mxu0 0
    %749 = vmatpush1.bf16.msra.mxu0 %v725
    %750 = vmatprep.subr.bf16.mxu0 0
    %751 = vmatpush1.bf16.msra.mxu0 0
    %752 = vmatprep.subr.bf16.mxu0 0
    %753 = vmatpush1.bf16.msra.mxu0 0
    %754 = vmatprep.subr.bf16.mxu0 0
    %755 = vmatpush1.bf16.msra.mxu0 0
    %756 = vmatprep.subr.bf16.mxu0 0
    %757 = vmatpush1.bf16.msra.mxu0 0
    %758 = vmatprep.subr.bf16.mxu0 0
    %759 = vmatpush1.bf16.msra.mxu0 0
    %760 = vmatprep.subr.bf16.mxu0 0
    %761 = vmatpush1.bf16.msra.mxu0 0
    %762 = vmatprep.subr.bf16.mxu0 0
    %763 = vmatpush1.bf16.msra.mxu0 0
    %764 = vmatprep.subr.bf16.mxu0 0
    %765 = vmatpush1.bf16.msra.mxu0 0
    %766 = vmatprep.mubr.bf16.mxu0 0
    %767 = vmatmul.mubr.bf16.gmra.mrb[0].mxu0 %v681
    %v768 = vpop.f32.mrb[0].mxu0
    %v769 = vadd.f32 %v685, %v768
    %v770 = vpop.f32.mrb[0].mxu0
    %v771 = vpop.f32.mrb[0].mxu0
    %v772 = vadd.f32 %v685, %v771
    %v773 = vpop.f32.mrb[0].mxu0
    %774 = vdwg.mxu0
    %v775 = vld [vmem:[#allocation2] sm:$0xf]
    %v776 = vpack.c.bf16 %v772, %v769
    %v778 = vsel %vm272, %v775, 0
    %780 = vmatprep.subr.bf16.mxu0 0
    %781 = vmatpush1.bf16.msra.mxu0 %v776
    %782 = vmatprep.subr.bf16.mxu0 0
    %783 = vmatpush1.bf16.msra.mxu0 0
    %784 = vmatprep.subr.bf16.mxu0 0
    %785 = vmatpush1.bf16.msra.mxu0 0
    %786 = vmatprep.subr.bf16.mxu0 0
    %787 = vmatpush1.bf16.msra.mxu0 0
    %788 = vmatprep.subr.bf16.mxu0 0
    %789 = vmatpush1.bf16.msra.mxu0 0
    %790 = vmatprep.subr.bf16.mxu0 0
    %791 = vmatpush1.bf16.msra.mxu0 0
    %792 = vmatprep.subr.bf16.mxu0 0
    %793 = vmatpush1.bf16.msra.mxu0 0
    %794 = vmatprep.subr.bf16.mxu0 0
    %795 = vmatpush1.bf16.msra.mxu0 0
    %796 = vmatprep.subr.bf16.mxu0 0
    %797 = vmatpush1.bf16.msra.mxu0 0
    %798 = vmatprep.subr.bf16.mxu0 0
    %799 = vmatpush1.bf16.msra.mxu0 0
    %800 = vmatprep.subr.bf16.mxu0 0
    %801 = vmatpush1.bf16.msra.mxu0 0
    %802 = vmatprep.subr.bf16.mxu0 0
    %803 = vmatpush1.bf16.msra.mxu0 0
    %804 = vmatprep.subr.bf16.mxu0 0
    %805 = vmatpush1.bf16.msra.mxu0 0
    %806 = vmatprep.subr.bf16.mxu0 0
    %807 = vmatpush1.bf16.msra.mxu0 0
    %808 = vmatprep.subr.bf16.mxu0 0
    %809 = vmatpush1.bf16.msra.mxu0 0
    %810 = vmatprep.subr.bf16.mxu0 0
    %811 = vmatpush1.bf16.msra.mxu0 0
    %812 = vmatprep.mubr.bf16.mxu0 0
    %813 = vmatmul.mubr.bf16.gmra.mrb[0].mxu0 %v778
    %v814 = vpop.f32.mrb[0].mxu0
    %v815 = vadd.f32 0.0, %v814
    %v816 = vpop.f32.mrb[0].mxu0
    %v817 = vpop.f32.mrb[0].mxu0
    %v818 = vpop.f32.mrb[0].mxu0
    %819 = vdwg.mxu0
    %v820 = vld [vmem:[#allocation5 + $0x148] sm:$0xf]
    %v821 = vld [vmem:[#allocation5 + $0x14c] sm:$0xf]
    %v822 = vld [vmem:[#allocation5 + $0x150] sm:$0xf]
    %v823 = vld [vmem:[#allocation5 + $0x154] sm:$0xf]
    %v824 = vld [vmem:[#allocation5 + $0x158] sm:$0xf]
    %v825 = vld [vmem:[#allocation5 + $0x15c] sm:$0xf]
    %v826 = vld [vmem:[#allocation5 + $0x160] sm:$0xf]
    %v827 = vld [vmem:[#allocation5 + $0x164] sm:$0xf]
    %v828 = vld [vmem:[#allocation5 + $0x168] sm:$0xf]
    %v829 = vld [vmem:[#allocation5 + $0x16c] sm:$0xf]
    %v830 = vld [vmem:[#allocation5 + $0x170] sm:$0xf]
    %v831 = vld [vmem:[#allocation5 + $0x174] sm:$0xf]
    %v832 = vld [vmem:[#allocation5 + $0x178] sm:$0xf]
    %v833 = vld [vmem:[#allocation5 + $0x17c] sm:$0xf]
    %v834 = vld [vmem:[#allocation5 + $0x180] sm:$0xf]
    %v835 = vld [vmem:[#allocation5 + $0x184] sm:$0xf]
    %v836 = vld [vmem:[#allocation5 + $0x188] sm:$0xf]
    %v837 = vld [vmem:[#allocation5 + $0x18c] sm:$0xf]
    %v838 = vld [vmem:[#allocation5 + $0x190] sm:$0xf]
    %v839 = vld [vmem:[#allocation5 + $0x194] sm:$0xf]
    %v840 = vld [vmem:[#allocation5 + $0x198] sm:$0xf]
    %v841 = vld [vmem:[#allocation5 + $0x19c] sm:$0xf]
    %v842 = vld [vmem:[#allocation5 + $0x1a0] sm:$0xf]
    %v843 = vld [vmem:[#allocation5 + $0x1a4] sm:$0xf]
    %v844 = vld [vmem:[#allocation5 + $0x1a8] sm:$0xf]
    %v845 = vld [vmem:[#allocation5 + $0x1ac] sm:$0xf]
    %v846 = vld [vmem:[#allocation5 + $0x1b0] sm:$0xf]
    %v847 = vld [vmem:[#allocation5 + $0x1b4] sm:$0xf]
    %v848 = vld [vmem:[#allocation5 + $0x1b8] sm:$0xf]
    %v849 = vld [vmem:[#allocation5 + $0x1bc] sm:$0xf]
    %v850 = vld [vmem:[#allocation5 + $0x1c0] sm:$0xf]
    %v851 = vld [vmem:[#allocation5 + $0x1c4] sm:$0xf]
    %v852 = vld [vmem:[%s5 + $0x5] sm:$0x1]
    %v853 = vld [vmem:[%s5 + $0x6] sm:$0x1]
    %v854 = vpack.c.bf16 %v815, %v815
    %v855 = vlaneseq
    %v856 = vshrl.u32 %v855, 7
    %v857 = vsub.s32 0, %v856
    %v858 = vrot.slane %v852, %v857
    %v875 = vunpack.c.l.b16 %v820
    %v876 = vunpack.c.l.b16 %v821
    %v877 = vunpack.c.l.b16 %v822
    %v878 = vunpack.c.l.b16 %v823
    %v879 = vunpack.c.l.b16 %v824
    %v880 = vunpack.c.l.b16 %v825
    %v881 = vunpack.c.l.b16 %v826
    %v882 = vunpack.c.l.b16 %v827
    %v883 = vunpack.c.l.b16 %v828
    %v884 = vunpack.c.l.b16 %v829
    %v885 = vunpack.c.l.b16 %v830
    %v886 = vunpack.c.l.b16 %v831
    %v887 = vunpack.c.l.b16 %v832
    %v888 = vunpack.c.l.b16 %v833
    %v889 = vunpack.c.l.b16 %v834
    %v890 = vunpack.c.l.b16 %v835
    %v891 = vpack.c.b16 %v876, %v875
    %v892 = vpack.c.b16 %v878, %v877
    %v893 = vpack.c.b16 %v880, %v879
    %v894 = vpack.c.b16 %v882, %v881
    %v895 = vpack.c.b16 %v884, %v883
    %v896 = vpack.c.b16 %v886, %v885
    %v897 = vpack.c.b16 %v888, %v887
    %v898 = vpack.c.b16 %v890, %v889
    %907 = vmatprep.subr.bf16.mxu0 0
    %908 = vmatpush1.bf16.msra.mxu0 %v891
    %909 = vmatprep.subr.bf16.mxu0 0
    %910 = vmatpush1.bf16.msra.mxu0 %v892
    %911 = vmatprep.subr.bf16.mxu0 0
    %912 = vmatpush1.bf16.msra.mxu0 %v893
    %913 = vmatprep.subr.bf16.mxu0 0
    %914 = vmatpush1.bf16.msra.mxu0 %v894
    %915 = vmatprep.subr.bf16.mxu0 0
    %916 = vmatpush1.bf16.msra.mxu0 %v895
    %917 = vmatprep.subr.bf16.mxu0 0
    %918 = vmatpush1.bf16.msra.mxu0 %v896
    %919 = vmatprep.subr.bf16.mxu0 0
    %920 = vmatpush1.bf16.msra.mxu0 %v897
    %921 = vmatprep.subr.bf16.mxu0 0
    %922 = vmatpush1.bf16.msra.mxu0 %v898
    %923 = vmatprep.subr.bf16.mxu0 0
    %924 = vmatpush1.bf16.msra.mxu0 0
    %925 = vmatprep.subr.bf16.mxu0 0
    %926 = vmatpush1.bf16.msra.mxu0 0
    %927 = vmatprep.subr.bf16.mxu0 0
    %928 = vmatpush1.bf16.msra.mxu0 0
    %929 = vmatprep.subr.bf16.mxu0 0
    %930 = vmatpush1.bf16.msra.mxu0 0
    %931 = vmatprep.subr.bf16.mxu0 0
    %932 = vmatpush1.bf16.msra.mxu0 0
    %933 = vmatprep.subr.bf16.mxu0 0
    %934 = vmatpush1.bf16.msra.mxu0 0
    %935 = vmatprep.subr.bf16.mxu0 0
    %936 = vmatpush1.bf16.msra.mxu0 0
    %937 = vmatprep.subr.bf16.mxu0 0
    %938 = vmatpush1.bf16.msra.mxu0 0
    %939 = vmatprep.mubr.bf16.mxu0 0
    %940 = vmatmul.mubr.bf16.gmra.mrb[0].mxu0 %v854
    %v941 = vpop.f32.mrb[0].mxu0
    %v942 = vadd.f32 %v858, %v941
    %v943 = vpop.f32.mrb[0].mxu0
    %v944 = vpop.f32.mrb[0].mxu0
    %v945 = vpop.f32.mrb[0].mxu0
    %946 = vdwg.mxu0
    %v947 = vmax.f32 %v942, 0.0
    %v948 = vpack.c.bf16 %v947, %v947
    %v949 = vlaneseq
    %v950 = vshrl.u32 %v949, 7
    %v951 = vsub.s32 0, %v950
    %v952 = vrot.slane %v853, %v951
    %v969 = vunpack.c.l.b16 %v836
    %v970 = vunpack.c.l.b16 %v837
    %v971 = vunpack.c.l.b16 %v838
    %v972 = vunpack.c.l.b16 %v839
    %v973 = vunpack.c.l.b16 %v840
    %v974 = vunpack.c.l.b16 %v841
    %v975 = vunpack.c.l.b16 %v842
    %v976 = vunpack.c.l.b16 %v843
    %v977 = vunpack.c.l.b16 %v844
    %v978 = vunpack.c.l.b16 %v845
    %v979 = vunpack.c.l.b16 %v846
    %v980 = vunpack.c.l.b16 %v847
    %v981 = vunpack.c.l.b16 %v848
    %v982 = vunpack.c.l.b16 %v849
    %v983 = vunpack.c.l.b16 %v850
    %v984 = vunpack.c.l.b16 %v851
    %v985 = vpack.c.b16 %v970, %v969
    %v986 = vpack.c.b16 %v972, %v971
    %v987 = vpack.c.b16 %v974, %v973
    %v988 = vpack.c.b16 %v976, %v975
    %v989 = vpack.c.b16 %v978, %v977
    %v990 = vpack.c.b16 %v980, %v979
    %v991 = vpack.c.b16 %v982, %v981
    %v992 = vpack.c.b16 %v984, %v983
    %1001 = vmatprep.subr.bf16.mxu0 0
    %1002 = vmatpush1.bf16.msra.mxu0 %v985
    %1003 = vmatprep.subr.bf16.mxu0 0
    %1004 = vmatpush1.bf16.msra.mxu0 %v986
    %1005 = vmatprep.subr.bf16.mxu0 0
    %1006 = vmatpush1.bf16.msra.mxu0 %v987
    %1007 = vmatprep.subr.bf16.mxu0 0
    %1008 = vmatpush1.bf16.msra.mxu0 %v988
    %1009 = vmatprep.subr.bf16.mxu0 0
    %1010 = vmatpush1.bf16.msra.mxu0 %v989
    %1011 = vmatprep.subr.bf16.mxu0 0
    %1012 = vmatpush1.bf16.msra.mxu0 %v990
    %1013 = vmatprep.subr.bf16.mxu0 0
    %1014 = vmatpush1.bf16.msra.mxu0 %v991
    %1015 = vmatprep.subr.bf16.mxu0 0
    %1016 = vmatpush1.bf16.msra.mxu0 %v992
    %1017 = vmatprep.subr.bf16.mxu0 0
    %1018 = vmatpush1.bf16.msra.mxu0 0
    %1019 = vmatprep.subr.bf16.mxu0 0
    %1020 = vmatpush1.bf16.msra.mxu0 0
    %1021 = vmatprep.subr.bf16.mxu0 0
    %1022 = vmatpush1.bf16.msra.mxu0 0
    %1023 = vmatprep.subr.bf16.mxu0 0
    %1024 = vmatpush1.bf16.msra.mxu0 0
    %1025 = vmatprep.subr.bf16.mxu0 0
    %1026 = vmatpush1.bf16.msra.mxu0 0
    %1027 = vmatprep.subr.bf16.mxu0 0
    %1028 = vmatpush1.bf16.msra.mxu0 0
    %1029 = vmatprep.subr.bf16.mxu0 0
    %1030 = vmatpush1.bf16.msra.mxu0 0
    %1031 = vmatprep.subr.bf16.mxu0 0
    %1032 = vmatpush1.bf16.msra.mxu0 0
    %1033 = vmatprep.mubr.bf16.mxu0 0
    %1034 = vmatmul.mubr.bf16.gmra.mrb[0].mxu0 %v948
    %v1035 = vpop.f32.mrb[0].mxu0
    %v1036 = vadd.f32 %v952, %v1035
    %v1037 = vpop.f32.mrb[0].mxu0
    %v1038 = vpop.f32.mrb[0].mxu0
    %v1039 = vpop.f32.mrb[0].mxu0
    %1040 = vdwg.mxu0
    %1041 = vst [vmem:[#allocation7] sm:$0xff] %v1036
    // Predicated region
    $region34: #{tpu_custom_call.1} parent=1 // pred_check
      _
    $region35: #{tpu_custom_call.1} parent=1 // pred_check_branch
      %1043 = sbr.rel (0) target = $region37
    $region36: #{tpu_custom_call.1} parent=1 // pred_region
      %s1045 = ssub.s32 128, 128
      %1046 = vsyncadd [#allocation4], %s1045
      %s1048 = sshll.u32 [#allocation7], 4
      %s1049 = int_to_ptr.vmem [resolvable:$true] %s1048
      %1051 = dma.vmem_to_hbm [thread:$0]  %s1049, 128, %s6, [#allocation4]
    $region37: #{tpu_custom_call.1} parent=1 // pred_fallthru
      _
    // Predicated region
    $region38: #{tpu_custom_call.1} parent=1 // pred_check
      _
    $region39: #{tpu_custom_call.1} parent=1 // pred_check_branch
      %1053 = sbr.rel (0) target = $region41
    $region40: #{tpu_custom_call.1} parent=1 // pred_region
      %1054 = dma.done [#allocation4], 128
    $region41: #{tpu_custom_call.1} parent=1 // pred_fallthru
      _
    %1055 = vsyncpa [#allocation3], 1
    %1056 = vsyncpa [#allocation6], 1
    %1057 = vsyncpa [#allocation4], 1

</llo_original>
